<compile_context>
chip_gen: v5e
topology: v5e:2x2
jax: 0.10.0
libtpu: 0.0.40
codegen_flags: <defaults>
</compile_context>

<pallas_src>
import math

import jax
import jax.numpy as jnp
from jax.experimental import pallas as pl
from jax.experimental.pallas import tpu as pltpu


# ----------------------------------------------------------------------------
# Glue: dense normalized adjacency  A_hat = D^{-1/2} (A + I) D^{-1/2}
# (matches torch_geometric.nn.GCNConv's gcn_norm with add_self_loops=True)
# ----------------------------------------------------------------------------
def build_norm_adj(edge_index, num_nodes):
    src = edge_index[0]
    dst = edge_index[1]
    adj = jnp.zeros((num_nodes, num_nodes), dtype=jnp.float32)
    # message flows src -> dst, aggregation at dst  =>  A[dst, src] += 1
    adj = adj.at[dst, src].add(1.0)
    adj = adj + jnp.eye(num_nodes, dtype=jnp.float32)          # self loops
    deg = jnp.sum(adj, axis=1)
    d_inv_sqrt = 1.0 / jnp.sqrt(deg)
    return d_inv_sqrt[:, None] * adj * d_inv_sqrt[None, :]


# ----------------------------------------------------------------------------
# Pallas kernel: fused stack of GCN layers + folded sum/sqrt(N) readout.
# One grid step == one PACK of B graphs (block-diagonal A_hat, stacked features).
# ----------------------------------------------------------------------------
def make_graph_transformer_kernel(num_gnn_layers, num_nodes):
    inv_sqrt_n = 1.0 / math.sqrt(num_nodes)
    bias_scale = num_nodes * inv_sqrt_n       # sum_n b = N * b, then / sqrt(N)

    def kernel(a_ref, r_ref, x_ref, *refs):
        # refs = (w_0, b_0, w_1, b_1, ..., out)
        param_refs = refs[:-1]
        out_ref = refs[-1]

        a = a_ref[0]                          # [B*N, B*N]  bf16, block-diagonal
        h = x_ref[0]                          # [B*N, F]    bf16, stacked graphs

        # Intermediate layers: h <- A_bd @ (h @ W) + b   (bf16 operands, f32 acc)
        for layer in range(num_gnn_layers - 1):
            w = param_refs[2 * layer][...]            # [F_in, F_out] bf16
            b = param_refs[2 * layer + 1][...]        # [1, F_out]    f32
            xw = jnp.dot(h, w, preferred_element_type=jnp.float32)            # MXU
            h = (jnp.dot(a, xw.astype(jnp.bfloat16),
                         preferred_element_type=jnp.float32) + b).astype(jnp.bfloat16)

        # Last layer fused with the readout (per graph g of the pack):
        #   sum_n (A_g @ (h_g W_L) + b_L)_n / sqrt(N)
        # = ((1^T A_g) @ (h_g W_L)) / sqrt(N) + N * b_L / sqrt(N)
        # realized for all B graphs at once with the block-diagonal r matrix.
        w = param_refs[2 * (num_gnn_layers - 1)][...]
        b = param_refs[2 * (num_gnn_layers - 1) + 1][...]
        xw = jnp.dot(h, w, preferred_element_type=jnp.float32)                # [B*N, H] f32
        r = r_ref[0]                                                          # [B, B*N] bf16
        pooled = jnp.dot(r, xw.astype(jnp.bfloat16),
                         preferred_element_type=jnp.float32)                  # [B, H]   f32
        out_ref[0] = (pooled * inv_sqrt_n + bias_scale * b).astype(out_ref.dtype)

    return kernel


# ----------------------------------------------------------------------------
# Wrapper: pack B graphs per grid step (block-diagonal A_hat / r, stacked x).
# ----------------------------------------------------------------------------
def graph_transformer_net(edge_index_batch, node_features_batch, weights, biases,
                          graphs_per_block=None):
    """edge_index_batch: [G, 2, E] int32; node_features_batch: [G, N, F];
    weights: list of [F_in, F_out]; biases: list of [F_out].  Returns [G, H]."""
    num_graphs, num_nodes, feat = node_features_batch.shape
    num_layers = len(weights)
    hidden = weights[-1].shape[1]

    # Pick B so the packed row dimension B*N is ~128 (fills the v5e MXU, half of
    # v6e/v7x) without blowing up the (B*N)^2 block-diagonal adjacency.
    if graphs_per_block is None:
        graphs_per_block = max(1, min(num_graphs, 128 // num_nodes))
    B = graphs_per_block
    num_blocks = pl.cdiv(num_graphs, B)
    padded_graphs = num_blocks * B
    bn = B * num_nodes

    # Dense normalized adjacency per graph (plain-JAX glue) and r = 1^T A_hat
    # (column sums) used to fold the final node-sum into the readout matmul.
    a_hat = jax.vmap(lambda ei: build_norm_adj(ei, num_nodes))(edge_index_batch)  # [G,N,N]
    r = jnp.sum(a_hat, axis=1)                                                    # [G,N]
    x = node_features_batch.astype(jnp.float32)

    # Pad the batch with harmless dummy graphs (identity adjacency, zero features)
    # so it divides evenly into packs; padded outputs are sliced off at the end.
    if padded_graphs != num_graphs:
        pad = padded_graphs - num_graphs
        a_hat = jnp.concatenate(
            [a_hat, jnp.broadcast_to(jnp.eye(num_nodes, dtype=jnp.float32),
                                     (pad, num_nodes, num_nodes))], axis=0)
        r = jnp.concatenate([r, jnp.ones((pad, num_nodes), jnp.float32)], axis=0)
        x = jnp.concatenate([x, jnp.zeros((pad, num_nodes, feat), jnp.float32)], axis=0)

    # Block-diagonal packing:
    #   a_bd[j] = blockdiag(A_hat[j*B], ..., A_hat[j*B+B-1])        -> [nb, B*N, B*N]
    #   r_bd[j, g, g*N:(g+1)*N] = 1^T A_hat[j*B+g]                  -> [nb, B,   B*N]
    eye_b = jnp.eye(B, dtype=jnp.float32)
    a_g = a_hat.reshape(num_blocks, B, num_nodes, num_nodes)
    a_bd = jnp.einsum('jbmn,bc->jbmcn', a_g, eye_b).reshape(num_blocks, bn, bn)
    r_g = r.reshape(num_blocks, B, num_nodes)
    r_bd = jnp.einsum('jbn,bc->jbcn', r_g, eye_b).reshape(num_blocks, B, bn)

    a_bd = a_bd.astype(jnp.bfloat16)
    r_bd = r_bd.astype(jnp.bfloat16)
    x_bd = x.reshape(num_blocks, bn, feat).astype(jnp.bfloat16)

    params = []
    in_specs = [
        pl.BlockSpec((1, bn, bn), lambda j: (j, 0, 0)),     # block-diag A_hat (per pack)
        pl.BlockSpec((1, B, bn), lambda j: (j, 0, 0)),      # block-diag 1^T A (per pack)
        pl.BlockSpec((1, bn, feat), lambda j: (j, 0, 0)),   # stacked node features
    ]
    for w, b in zip(weights, biases):
        params.append(w.astype(jnp.bfloat16))
        params.append(b.reshape(1, -1).astype(jnp.float32))
        in_specs.append(pl.BlockSpec(w.shape, lambda j: (0, 0)))          # shared weight
        in_specs.append(pl.BlockSpec((1, b.shape[0]), lambda j: (0, 0)))  # shared bias

    kernel = make_graph_transformer_kernel(num_layers, num_nodes)

    out = pl.pallas_call(
        kernel,
        out_shape=jax.ShapeDtypeStruct((num_blocks, B, hidden), jnp.float32),
        grid=(num_blocks,),
        in_specs=in_specs,
        out_specs=pl.BlockSpec((1, B, hidden), lambda j: (j, 0, 0)),
        compiler_params=pltpu.CompilerParams(
            dimension_semantics=("parallel",),     # independent packs -> megacore/2-TC
            vmem_limit_bytes=32 << 20,             # safe headroom on v5e/v6e/v7x
        ),
    )(a_bd, r_bd, x_bd, *params)

    return out.reshape(padded_graphs, hidden)[:num_graphs]   # [G, H]


# ----------------------------------------------------------------------------
# Pure-JAX f32 reference (per-graph torch semantics, vmapped over the batch)
# ----------------------------------------------------------------------------
def reference(edge_index_batch, node_features_batch, weights, biases):
    def single(ei, x):
        a = build_norm_adj(ei, x.shape[0])
        h = x.astype(jnp.float32)
        for w, b in zip(weights, biases):
            h = a @ (h @ w) + b[None, :]
        return jnp.sum(h, axis=0) / math.sqrt(h.shape[0])

    return jax.vmap(single)(edge_index_batch, node_features_batch)


if __name__ == "__main__":
    # Small, module-consistent shapes.
    feature_dim_size = 32     # F
    ff_hidden_size = 32       # H (must equal F for num_GNN_layers > 1, see note)
    num_GNN_layers = 2
    num_self_att_layers = 1   # unused in forward
    nhead = 4                 # unused in forward
    num_nodes = 8
    num_graphs = 32           # -> B=16 graphs/pack, 2 packed grid steps

    key = jax.random.PRNGKey(0)
    k_x, k_w = jax.random.split(key)

    node_features = jax.random.normal(
        k_x, (num_graphs, num_nodes, feature_dim_size), dtype=jnp.float32
    )

    # Deterministic per-graph ring graphs with varying stride, edge_index [G, 2, 2N].
    base = jnp.arange(num_nodes, dtype=jnp.int32)
    edge_index_list = []
    for g in range(num_graphs):
        stride = (g % 3) + 1
        src = base
        dst = (base + stride) % num_nodes
        ei = jnp.concatenate(
            [jnp.stack([src, dst]), jnp.stack([dst, src])], axis=1
        )
        edge_index_list.append(ei)
    edge_index = jnp.stack(edge_index_list)   # [G, 2, 2N]

    # Deterministic GCNConv parameters (glorot-ish weights, zero bias as in PyG).
    weights, biases = [], []
    wkeys = jax.random.split(k_w, num_GNN_layers)
    for layer in range(num_GNN_layers):
        fan_in = feature_dim_size if layer == 0 else ff_hidden_size
        scale = math.sqrt(6.0 / (fan_in + ff_hidden_size))
        weights.append(
            scale
            * jax.random.uniform(
                wkeys[layer], (fan_in, ff_hidden_size),
                minval=-1.0, maxval=1.0, dtype=jnp.float32,
            )
        )
        biases.append(jnp.zeros((ff_hidden_size,), dtype=jnp.float32))

    out = graph_transformer_net(edge_index, node_features, weights, biases)
    out = jax.block_until_ready(out)

    ref = reference(edge_index, node_features, weights, biases)
    assert out.shape == (num_graphs, ff_hidden_size)
    # bf16 MXU operands (f32 accumulation) -> small drift vs the pure-f32 reference.
    assert jnp.allclose(out, ref, atol=6e-2, rtol=5e-2), "mismatch vs reference"

    print("KERNEL_OK")
</pallas_src>

<mosaic_0001>
module attributes {stable_mosaic.version = 11 : i64} {
  func.func @kernel(%arg0: i32, %arg1: memref<1x128x128xbf16, #tpu.memory_space<vmem>>, %arg2: memref<1x16x128xbf16, #tpu.memory_space<vmem>>, %arg3: memref<1x128x32xbf16, #tpu.memory_space<vmem>>, %arg4: memref<32x32xbf16, #tpu.memory_space<vmem>>, %arg5: memref<1x32xf32, #tpu.memory_space<vmem>>, %arg6: memref<32x32xbf16, #tpu.memory_space<vmem>>, %arg7: memref<1x32xf32, #tpu.memory_space<vmem>>, %arg8: memref<1x16x32xf32, #tpu.memory_space<vmem>>) attributes {dimension_semantics = [#tpu.dimension_semantics<parallel>], iteration_bounds = array<i64: 2>, scalar_prefetch = 0 : i64, scratch_operands = 0 : i64, tpu.core_type = #tpu.core_type<tc>, window_params = [{transform_indices = @transform_0, window_bounds = array<i64: 1, 128, 128>}, {transform_indices = @transform_1, window_bounds = array<i64: 1, 16, 128>}, {transform_indices = @transform_2, window_bounds = array<i64: 1, 128, 32>}, {pipeline_mode = #tpu.pipeline_mode<synchronous>, transform_indices = @transform_3, window_bounds = array<i64: 32, 32>}, {pipeline_mode = #tpu.pipeline_mode<synchronous>, transform_indices = @transform_4, window_bounds = array<i64: 1, 32>}, {pipeline_mode = #tpu.pipeline_mode<synchronous>, transform_indices = @transform_5, window_bounds = array<i64: 32, 32>}, {pipeline_mode = #tpu.pipeline_mode<synchronous>, transform_indices = @transform_6, window_bounds = array<i64: 1, 32>}, {transform_indices = @transform_7, window_bounds = array<i64: 1, 16, 32>}]} {
    %c0 = arith.constant 0 : index
    %c0_0 = arith.constant 0 : index
    %c0_1 = arith.constant 0 : index
    %0 = vector.load %arg1[%c0, %c0_0, %c0_1] : memref<1x128x128xbf16, #tpu.memory_space<vmem>>, vector<1x128x128xbf16>
    %1 = vector.shape_cast %0 : vector<1x128x128xbf16> to vector<128x128xbf16>
    %c0_2 = arith.constant 0 : index
    %c0_3 = arith.constant 0 : index
    %c0_4 = arith.constant 0 : index
    %2 = vector.load %arg3[%c0_2, %c0_3, %c0_4] : memref<1x128x32xbf16, #tpu.memory_space<vmem>>, vector<1x128x32xbf16>
    %3 = vector.shape_cast %2 : vector<1x128x32xbf16> to vector<128x32xbf16>
    %c0_5 = arith.constant 0 : index
    %c0_6 = arith.constant 0 : index
    %4 = vector.load %arg4[%c0_5, %c0_6] : memref<32x32xbf16, #tpu.memory_space<vmem>>, vector<32x32xbf16>
    %c0_7 = arith.constant 0 : index
    %c0_8 = arith.constant 0 : index
    %5 = vector.load %arg5[%c0_7, %c0_8] : memref<1x32xf32, #tpu.memory_space<vmem>>, vector<1x32xf32>
    %cst = arith.constant dense<0.000000e+00> : vector<128x32xf32>
    %6 = tpu.matmul %3, %4, %cst {dimension_numbers = #tpu.dot_dimension_numbers<[1], [0], [0], [1], [0, 0, 1, 1], [], []>} : vector<128x32xbf16>, vector<32x32xbf16>, vector<128x32xf32> -> vector<128x32xf32>
    %7 = arith.truncf %6 : vector<128x32xf32> to vector<128x32xbf16>
    %cst_9 = arith.constant dense<0.000000e+00> : vector<128x32xf32>
    %8 = tpu.matmul %1, %7, %cst_9 {dimension_numbers = #tpu.dot_dimension_numbers<[1], [0], [0], [1], [0, 0, 1, 1], [], []>} : vector<128x128xbf16>, vector<128x32xbf16>, vector<128x32xf32> -> vector<128x32xf32>
    %9 = vector.broadcast %5 : vector<1x32xf32> to vector<128x32xf32>
    %10 = arith.addf %8, %9 : vector<128x32xf32>
    %11 = arith.truncf %10 : vector<128x32xf32> to vector<128x32xbf16>
    %c0_10 = arith.constant 0 : index
    %c0_11 = arith.constant 0 : index
    %12 = vector.load %arg6[%c0_10, %c0_11] : memref<32x32xbf16, #tpu.memory_space<vmem>>, vector<32x32xbf16>
    %c0_12 = arith.constant 0 : index
    %c0_13 = arith.constant 0 : index
    %13 = vector.load %arg7[%c0_12, %c0_13] : memref<1x32xf32, #tpu.memory_space<vmem>>, vector<1x32xf32>
    %cst_14 = arith.constant dense<0.000000e+00> : vector<128x32xf32>
    %14 = tpu.matmul %11, %12, %cst_14 {dimension_numbers = #tpu.dot_dimension_numbers<[1], [0], [0], [1], [0, 0, 1, 1], [], []>} : vector<128x32xbf16>, vector<32x32xbf16>, vector<128x32xf32> -> vector<128x32xf32>
    %c0_15 = arith.constant 0 : index
    %c0_16 = arith.constant 0 : index
    %c0_17 = arith.constant 0 : index
    %15 = vector.load %arg2[%c0_15, %c0_16, %c0_17] : memref<1x16x128xbf16, #tpu.memory_space<vmem>>, vector<1x16x128xbf16>
    %16 = vector.shape_cast %15 : vector<1x16x128xbf16> to vector<16x128xbf16>
    %17 = arith.truncf %14 : vector<128x32xf32> to vector<128x32xbf16>
    %cst_18 = arith.constant dense<0.000000e+00> : vector<16x32xf32>
    %18 = tpu.matmul %16, %17, %cst_18 {dimension_numbers = #tpu.dot_dimension_numbers<[1], [0], [0], [1], [0, 0, 1, 1], [], []>} : vector<16x128xbf16>, vector<128x32xbf16>, vector<16x32xf32> -> vector<16x32xf32>
    %cst_19 = arith.constant 0.353553385 : f32
    %19 = vector.broadcast %cst_19 : f32 to vector<16x32xf32>
    %20 = arith.mulf %18, %19 : vector<16x32xf32>
    %cst_20 = arith.constant 2.82842708 : f32
    %21 = vector.broadcast %cst_20 : f32 to vector<1x32xf32>
    %22 = arith.mulf %21, %13 : vector<1x32xf32>
    %23 = vector.broadcast %22 : vector<1x32xf32> to vector<16x32xf32>
    %24 = arith.addf %20, %23 : vector<16x32xf32>
    %c0_21 = arith.constant 0 : index
    %c0_22 = arith.constant 0 : index
    %c0_23 = arith.constant 0 : index
    %25 = vector.load %arg8[%c0_21, %c0_22, %c0_23] : memref<1x16x32xf32, #tpu.memory_space<vmem>>, vector<1x16x32xf32>
    %26 = vector.shape_cast %25 : vector<1x16x32xf32> to vector<16x32xf32>
    %27 = vector.shape_cast %24 : vector<16x32xf32> to vector<1x16x32xf32>
    tpu.vector_store %arg8[%c0_21, %c0_22, %c0_23], %27 {strides = array<i32>} : memref<1x16x32xf32, #tpu.memory_space<vmem>>, vector<1x16x32xf32>,
    return
  }
  func.func @transform_0(%arg0: i32) -> (i32, i32, i32) {
    %c0_i32 = arith.constant 0 : i32
    %c0_i32_0 = arith.constant 0 : i32
    %c0_i32_1 = arith.constant 0 : i32
    return %arg0, %c0_i32, %c0_i32_0 : i32, i32, i32
  }
  func.func @transform_1(%arg0: i32) -> (i32, i32, i32) {
    %c0_i32 = arith.constant 0 : i32
    %c0_i32_0 = arith.constant 0 : i32
    %c0_i32_1 = arith.constant 0 : i32
    return %arg0, %c0_i32, %c0_i32_0 : i32, i32, i32
  }
  func.func @transform_2(%arg0: i32) -> (i32, i32, i32) {
    %c0_i32 = arith.constant 0 : i32
    %c0_i32_0 = arith.constant 0 : i32
    %c0_i32_1 = arith.constant 0 : i32
    return %arg0, %c0_i32, %c0_i32_0 : i32, i32, i32
  }
  func.func @transform_3(%arg0: i32) -> (i32, i32) {
    %c0_i32 = arith.constant 0 : i32
    %c0_i32_0 = arith.constant 0 : i32
    %c0_i32_1 = arith.constant 0 : i32
    return %c0_i32, %c0_i32_0 : i32, i32
  }
  func.func @transform_4(%arg0: i32) -> (i32, i32) {
    %c0_i32 = arith.constant 0 : i32
    %c0_i32_0 = arith.constant 0 : i32
    %c0_i32_1 = arith.constant 0 : i32
    return %c0_i32, %c0_i32_0 : i32, i32
  }
  func.func @transform_5(%arg0: i32) -> (i32, i32) {
    %c0_i32 = arith.constant 0 : i32
    %c0_i32_0 = arith.constant 0 : i32
    %c0_i32_1 = arith.constant 0 : i32
    return %c0_i32, %c0_i32_0 : i32, i32
  }
  func.func @transform_6(%arg0: i32) -> (i32, i32) {
    %c0_i32 = arith.constant 0 : i32
    %c0_i32_0 = arith.constant 0 : i32
    %c0_i32_1 = arith.constant 0 : i32
    return %c0_i32, %c0_i32_0 : i32, i32
  }
  func.func @transform_7(%arg0: i32) -> (i32, i32, i32) {
    %c0_i32 = arith.constant 0 : i32
    %c0_i32_0 = arith.constant 0 : i32
    %c0_i32_1 = arith.constant 0 : i32
    return %arg0, %c0_i32, %c0_i32_0 : i32, i32, i32
  }
}

</mosaic_0001>

<llo_original>
// kernel: tpu_custom_call.1
$region0: #{tpu_custom_call.1}
  #allocation0 [shape = 'u32[]', space=smem, size = 0x4, offset = 0x4, fixed_abs, tag = 'smem constant byte address 0x4 - core index']
  #allocation1 [shape = 'u32[72,128]{1,0:T(1,128)}', space=vmem, size = 0x9000, scoped, tag = 'internal scratch']
  %s0 = inlined_call_operand.vmem [shape: bf16[2,128,128], index: 0, kind: input, shape index: {}]
  %s1 = inlined_call_operand.vmem [shape: bf16[2,16,128], index: 1, kind: input, shape index: {}]
  %s2 = inlined_call_operand.vmem [shape: bf16[2,128,32], index: 2, kind: input, shape index: {}]
  %s3 = inlined_call_operand.vmem [shape: bf16[32,32], index: 3, kind: input, shape index: {}]
  %s4 = inlined_call_operand.vmem [shape: f32[1,32], index: 4, kind: input, shape index: {}]
  %s5 = inlined_call_operand.hbm [shape: bf16[32,32], index: 5, kind: input, shape index: {}]
  %s6 = inlined_call_operand.vmem [shape: f32[1,32], index: 6, kind: input, shape index: {}]
  %s7 = inlined_call_operand.hbm [shape: f32[2,16,32], index: 7, kind: output, shape index: {}]
  %s8 = sld [smem:[#allocation0]]
  $region65: #{tpu_custom_call.1} parent=0
    _
  %s10 = ssub.s32 1, %s8
  %s11 = scalar_select 0, %s10, %s8
  $region1: #{tpu_custom_call.1} parent=0
    #allocation2 [shape = 'u8[8192]{0}', space=vmem, size = 0x2000, scoped, tag = 'input window, operand 5, single buffered']
    #allocation3 [shape = 's32[2]{0}', space=sflag, size = 0x8, scoped, tag = 'scoped memory for tpu_custom_call.1']
    #allocation4 [shape = 's32[2]{0}', space=sflag, size = 0x8, scoped, tag = 'scoped memory for tpu_custom_call.1']
    #allocation5 [shape = 'u8[16384]{0}', space=vmem, size = 0x4000, scoped, tag = 'output window, operand 0']
    %12 = vsyncpa [#allocation3], 0
    %13 = vsyncpa [#allocation4], 0
    %s14 = scalar_lea.sflag [#allocation4], 1
    %15 = vsyncpa %s14, 0
    loop: start=0, step=1, limit=4
    $region2: #{tpu_custom_call.1} parent=1 // loop_pre_header
      _
    $region3: #{tpu_custom_call.1} parent=1 // loop_header
      %s17 = sphi 0, %s21
      %p18 = scmp.ge.s32.totalorder %s17, 4
      %s27 = sphi 0, %s29
      %s30 = sphi 0, %s27
      %s31 = sphi 0, %s30
      %s47 = sphi 0, %s31
      %s53 = sphi 0, %s55
      %s56 = sphi 0, %s53
      %s57 = sphi 0, %s56
      %s73 = sphi 0, %s57
      %s79 = sphi 0, %s81
      %s82 = sphi 0, %s79
      %s83 = sphi 0, %s82
      %s99 = sphi 0, %s83
      %s103 = sphi 0, %s103
      %s105 = sphi 0, %s103
      %s106 = sphi 0, %s105
      %s120 = sphi 0, %s106
      %s124 = sphi 0, %s124
      %s126 = sphi 0, %s124
      %s127 = sphi 0, %s126
      %s141 = sphi 0, %s127
      %s145 = sphi 0, %s145
      %s147 = sphi 0, %s145
      %s148 = sphi 0, %s147
      %s162 = sphi 0, %s148
      %s166 = sphi 0, %s166
      %s168 = sphi 0, %s166
      %s169 = sphi 0, %s168
      %s183 = sphi 0, %s169
      %s189 = sphi 0, %s191
      %s192 = sphi 0, %s189
      %s193 = sphi 0, %s192
      %s209 = sphi 0, %s193
    $region4: #{tpu_custom_call.1} parent=1 // loop_header_branch
      %20 = sbr.rel (%p18) target = $region8
    $region5: #{tpu_custom_call.1} parent=1 // loop_body
      %s22 = ssub.s32 %s17, 1
      %s23 = ssub.s32 %s17, 2
      %s24 = sadd.s32 %s17, 1
      %s25 = ssub.s32 %s17, %s24
      %p26 = scmp.eq.s32.totalorder %s25, 0
      %s28 = sadd.s32 %s27, 1
      %s29 = scalar_select %p26, %s27, %s28
      %p32 = pneg %p26
      %p33 = scmp.eq.s32.totalorder %s17, 1
      %p34 = por %p32, %p33
      %p35 = scmp.ne.s32.totalorder %s27, %s30
      %p36 = scmp.eq.s32.totalorder %s17, 0
      %p37 = por %p35, %p36
      %p38 = scmp.ne.s32.totalorder %s27, %s30
      %p39 = scmp.eq.s32.totalorder %s22, 1
      %p40 = por %p38, %p39
      %p41 = scmp.ne.s32.totalorder %s30, %s31
      %p42 = scmp.eq.s32.totalorder %s22, 0
      %p43 = por %p41, %p42
      %p44 = scmp.ne.s32.totalorder %s30, %s31
      %p45 = scmp.eq.s32.totalorder %s23, 1
      %p46 = por %p44, %p45
      %p48 = scmp.ne.s32.totalorder %s31, %s47
      %p49 = scmp.eq.s32.totalorder %s23, 0
      %p50 = por %p48, %p49
      %s51 = ssub.s32 %s17, %s24
      %p52 = scmp.eq.s32.totalorder %s51, 0
      %s54 = sadd.s32 %s53, 1
      %s55 = scalar_select %p52, %s53, %s54
      %p58 = pneg %p52
      %p59 = scmp.eq.s32.totalorder %s17, 1
      %p60 = por %p58, %p59
      %p61 = scmp.ne.s32.totalorder %s53, %s56
      %p62 = scmp.eq.s32.totalorder %s17, 0
      %p63 = por %p61, %p62
      %p64 = scmp.ne.s32.totalorder %s53, %s56
      %p65 = scmp.eq.s32.totalorder %s22, 1
      %p66 = por %p64, %p65
      %p67 = scmp.ne.s32.totalorder %s56, %s57
      %p68 = scmp.eq.s32.totalorder %s22, 0
      %p69 = por %p67, %p68
      %p70 = scmp.ne.s32.totalorder %s56, %s57
      %p71 = scmp.eq.s32.totalorder %s23, 1
      %p72 = por %p70, %p71
      %p74 = scmp.ne.s32.totalorder %s57, %s73
      %p75 = scmp.eq.s32.totalorder %s23, 0
      %p76 = por %p74, %p75
      %s77 = ssub.s32 %s17, %s24
      %p78 = scmp.eq.s32.totalorder %s77, 0
      %s80 = sadd.s32 %s79, 1
      %s81 = scalar_select %p78, %s79, %s80
      %p84 = pneg %p78
      %p85 = scmp.eq.s32.totalorder %s17, 1
      %p86 = por %p84, %p85
      %p87 = scmp.ne.s32.totalorder %s79, %s82
      %p88 = scmp.eq.s32.totalorder %s17, 0
      %p89 = por %p87, %p88
      %p90 = scmp.ne.s32.totalorder %s79, %s82
      %p91 = scmp.eq.s32.totalorder %s22, 1
      %p92 = por %p90, %p91
      %p93 = scmp.ne.s32.totalorder %s82, %s83
      %p94 = scmp.eq.s32.totalorder %s22, 0
      %p95 = por %p93, %p94
      %p96 = scmp.ne.s32.totalorder %s82, %s83
      %p97 = scmp.eq.s32.totalorder %s23, 1
      %p98 = por %p96, %p97
      %p100 = scmp.ne.s32.totalorder %s83, %s99
      %p101 = scmp.eq.s32.totalorder %s23, 0
      %p102 = por %p100, %p101
      %s104 = sadd.s32 %s103, 1
      %p107 = scmp.eq.s32.totalorder %s17, 1
      %p108 = scmp.ne.s32.totalorder %s103, %s105
      %p109 = scmp.eq.s32.totalorder %s17, 0
      %p110 = por %p108, %p109
      %p111 = scmp.ne.s32.totalorder %s103, %s105
      %p112 = scmp.eq.s32.totalorder %s22, 1
      %p113 = por %p111, %p112
      %p114 = scmp.ne.s32.totalorder %s105, %s106
      %p115 = scmp.eq.s32.totalorder %s22, 0
      %p116 = por %p114, %p115
      %p117 = scmp.ne.s32.totalorder %s105, %s106
      %p118 = scmp.eq.s32.totalorder %s23, 1
      %p119 = por %p117, %p118
      %p121 = scmp.ne.s32.totalorder %s106, %s120
      %p122 = scmp.eq.s32.totalorder %s23, 0
      %p123 = por %p121, %p122
      %s125 = sadd.s32 %s124, 1
      %p128 = scmp.eq.s32.totalorder %s17, 1
      %p129 = scmp.ne.s32.totalorder %s124, %s126
      %p130 = scmp.eq.s32.totalorder %s17, 0
      %p131 = por %p129, %p130
      %p132 = scmp.ne.s32.totalorder %s124, %s126
      %p133 = scmp.eq.s32.totalorder %s22, 1
      %p134 = por %p132, %p133
      %p135 = scmp.ne.s32.totalorder %s126, %s127
      %p136 = scmp.eq.s32.totalorder %s22, 0
      %p137 = por %p135, %p136
      %p138 = scmp.ne.s32.totalorder %s126, %s127
      %p139 = scmp.eq.s32.totalorder %s23, 1
      %p140 = por %p138, %p139
      %p142 = scmp.ne.s32.totalorder %s127, %s141
      %p143 = scmp.eq.s32.totalorder %s23, 0
      %p144 = por %p142, %p143
      %s146 = sadd.s32 %s145, 1
      %p149 = scmp.eq.s32.totalorder %s17, 1
      %p150 = scmp.ne.s32.totalorder %s145, %s147
      %p151 = scmp.eq.s32.totalorder %s17, 0
      %p152 = por %p150, %p151
      %p153 = scmp.ne.s32.totalorder %s145, %s147
      %p154 = scmp.eq.s32.totalorder %s22, 1
      %p155 = por %p153, %p154
      %p156 = scmp.ne.s32.totalorder %s147, %s148
      %p157 = scmp.eq.s32.totalorder %s22, 0
      %p158 = por %p156, %p157
      %p159 = scmp.ne.s32.totalorder %s147, %s148
      %p160 = scmp.eq.s32.totalorder %s23, 1
      %p161 = por %p159, %p160
      %p163 = scmp.ne.s32.totalorder %s148, %s162
      %p164 = scmp.eq.s32.totalorder %s23, 0
      %p165 = por %p163, %p164
      %s167 = sadd.s32 %s166, 1
      %p170 = scmp.eq.s32.totalorder %s17, 1
      %p171 = scmp.ne.s32.totalorder %s166, %s168
      %p172 = scmp.eq.s32.totalorder %s17, 0
      %p173 = por %p171, %p172
      %p174 = scmp.ne.s32.totalorder %s166, %s168
      %p175 = scmp.eq.s32.totalorder %s22, 1
      %p176 = por %p174, %p175
      %p177 = scmp.ne.s32.totalorder %s168, %s169
      %p178 = scmp.eq.s32.totalorder %s22, 0
      %p179 = por %p177, %p178
      %p180 = scmp.ne.s32.totalorder %s168, %s169
      %p181 = scmp.eq.s32.totalorder %s23, 1
      %p182 = por %p180, %p181
      %p184 = scmp.ne.s32.totalorder %s169, %s183
      %p185 = scmp.eq.s32.totalorder %s23, 0
      %p186 = por %p184, %p185
      %s187 = ssub.s32 %s17, %s24
      %p188 = scmp.eq.s32.totalorder %s187, 0
      %s190 = sadd.s32 %s189, 1
      %s191 = scalar_select %p188, %s189, %s190
      %p194 = pneg %p188
      %p195 = scmp.eq.s32.totalorder %s17, 1
      %p196 = por %p194, %p195
      %p197 = scmp.ne.s32.totalorder %s189, %s192
      %p198 = scmp.eq.s32.totalorder %s17, 0
      %p199 = por %p197, %p198
      %p200 = scmp.ne.s32.totalorder %s189, %s192
      %p201 = scmp.eq.s32.totalorder %s22, 1
      %p202 = por %p200, %p201
      %p203 = scmp.ne.s32.totalorder %s192, %s193
      %p204 = scmp.eq.s32.totalorder %s22, 0
      %p205 = por %p203, %p204
      %p206 = scmp.ne.s32.totalorder %s192, %s193
      %p207 = scmp.eq.s32.totalorder %s23, 1
      %p208 = por %p206, %p207
      %p210 = scmp.ne.s32.totalorder %s193, %s209
      %p211 = scmp.eq.s32.totalorder %s23, 0
      %p212 = por %p210, %p211
      %p213 = scmp.le.s32.totalorder 1, %s17
      %p214 = scmp.lt.s32.totalorder %s17, 3
      %p215 = pnand %p213, %p214
      %p216 = pneg %p215
      // Predicated region
      $region9: #{tpu_custom_call.1} parent=5 // pred_check
        _
      $region10: #{tpu_custom_call.1} parent=5 // pred_check_branch
        %218 = sbr.rel (%p215) target = $region12
      $region11: #{tpu_custom_call.1} parent=5 // pred_region
        %s219 = ssub.s32 %s17, 1
        // Predicated region
        $region13: #{tpu_custom_call.1} parent=11 // pred_check
          %p220 = pneg %p116
        $region14: #{tpu_custom_call.1} parent=11 // pred_check_branch
          %222 = sbr.rel (%p220) target = $region16
        $region15: #{tpu_custom_call.1} parent=11 // pred_region
          _
        $region16: #{tpu_custom_call.1} parent=11 // pred_fallthru
          _
        // Predicated region
        $region17: #{tpu_custom_call.1} parent=11 // pred_check
          %p223 = pneg %p137
        $region18: #{tpu_custom_call.1} parent=11 // pred_check_branch
          %225 = sbr.rel (%p223) target = $region20
        $region19: #{tpu_custom_call.1} parent=11 // pred_region
          _
        $region20: #{tpu_custom_call.1} parent=11 // pred_fallthru
          _
        // Predicated region
        $region21: #{tpu_custom_call.1} parent=11 // pred_check
          %p226 = pneg %p158
        $region22: #{tpu_custom_call.1} parent=11 // pred_check_branch
          %228 = sbr.rel (%p226) target = $region24
        $region23: #{tpu_custom_call.1} parent=11 // pred_region
          %230 = vsyncadd [#allocation3], 0
          %s231 = sshll.u32 %s5, 4
          %s232 = int_to_ptr.hbm [resolvable:$true] %s231
          %s233 = sshll.u32 [#allocation2], 4
          %s234 = int_to_ptr.vmem [resolvable:$true] %s233
          %239 = dma.hbm_to_vmem [thread:$0]  %s232, 256, %s234, [#allocation3], 64, 64, 4
        $region24: #{tpu_custom_call.1} parent=11 // pred_fallthru
          _
        // Predicated region
        $region25: #{tpu_custom_call.1} parent=11 // pred_check
          %p240 = pneg %p179
        $region26: #{tpu_custom_call.1} parent=11 // pred_check_branch
          %242 = sbr.rel (%p240) target = $region28
        $region27: #{tpu_custom_call.1} parent=11 // pred_region
          _
        $region28: #{tpu_custom_call.1} parent=11 // pred_fallthru
          _
      $region12: #{tpu_custom_call.1} parent=5 // pred_fallthru
        _
      %p243 = scmp.lt.s32.totalorder %s17, 2
      // Predicated region
      $region29: #{tpu_custom_call.1} parent=5 // pred_check
        %p244 = pneg %p243
      $region30: #{tpu_custom_call.1} parent=5 // pred_check_branch
        %246 = sbr.rel (%p244) target = $region32
      $region31: #{tpu_custom_call.1} parent=5 // pred_region
        // Predicated region
        $region33: #{tpu_custom_call.1} parent=31 // pred_check
          %p247 = pneg %p37
        $region34: #{tpu_custom_call.1} parent=31 // pred_check_branch
          %249 = sbr.rel (%p247) target = $region36
        $region35: #{tpu_custom_call.1} parent=31 // pred_region
          %p250 = scmp.lt.s32.totalorder %s17, 1
          %s251 = scalar_select %p250, %s17, 1
          %s252 = smul.addr %s251, 16
          %s253 = smul.addr %s252, 4
          %s254 = scalar_lea.vmem %s0, %s253
        $region36: #{tpu_custom_call.1} parent=31 // pred_fallthru
          _
        // Predicated region
        $region37: #{tpu_custom_call.1} parent=31 // pred_check
          %p255 = pneg %p63
        $region38: #{tpu_custom_call.1} parent=31 // pred_check_branch
          %257 = sbr.rel (%p255) target = $region40
        $region39: #{tpu_custom_call.1} parent=31 // pred_region
          %p258 = scmp.lt.s32.totalorder %s17, 1
          %s259 = scalar_select %p258, %s17, 1
          %s260 = smul.addr %s259, 2
          %s261 = smul.addr %s260, 4
          %s262 = scalar_lea.vmem %s1, %s261
        $region40: #{tpu_custom_call.1} parent=31 // pred_fallthru
          _
        // Predicated region
        $region41: #{tpu_custom_call.1} parent=31 // pred_check
          %p263 = pneg %p89
        $region42: #{tpu_custom_call.1} parent=31 // pred_check_branch
          %265 = sbr.rel (%p263) target = $region44
        $region43: #{tpu_custom_call.1} parent=31 // pred_region
          %p266 = scmp.lt.s32.totalorder %s17, 1
          %s267 = scalar_select %p266, %s17, 1
          %s268 = smul.addr %s267, 16
          %s269 = smul.addr %s268, 4
          %s270 = scalar_lea.vmem %s2, %s269
        $region44: #{tpu_custom_call.1} parent=31 // pred_fallthru
          _
      $region32: #{tpu_custom_call.1} parent=5 // pred_fallthru
        _
      %p271 = scmp.le.s32.totalorder 1, %s17
      %p272 = scmp.lt.s32.totalorder %s17, 3
      %p273 = pnand %p271, %p272
      %p274 = pneg %p273
      // Predicated region
      $region45: #{tpu_custom_call.1} parent=5 // pred_check
        _
      $region46: #{tpu_custom_call.1} parent=5 // pred_check_branch
        %276 = sbr.rel (%p273) target = $region48
      $region47: #{tpu_custom_call.1} parent=5 // pred_region
        %s277 = ssub.s32 %s17, 1
        // Predicated region
        $region49: #{tpu_custom_call.1} parent=47 // pred_check
          %p278 = pneg %p158
        $region50: #{tpu_custom_call.1} parent=47 // pred_check_branch
          %280 = sbr.rel (%p278) target = $region52
        $region51: #{tpu_custom_call.1} parent=47 // pred_region
          %282 = dma.done [#allocation3], 256
        $region52: #{tpu_custom_call.1} parent=47 // pred_fallthru
          _
        %p283 = scmp.lt.s32.totalorder %s22, 1
        %s284 = scalar_select %p283, %s22, 1
        %s285 = smul.addr %s284, 16
        %s286 = smul.addr %s285, 4
        %s287 = scalar_lea.vmem %s0, %s286
        %p288 = pneg %p43
        %p289 = pneg %p40
        %p290 = scmp.lt.s32.totalorder %s22, 1
        %s291 = scalar_select %p290, %s22, 1
        %s292 = smul.addr %s291, 2
        %s293 = smul.addr %s292, 4
        %s294 = scalar_lea.vmem %s1, %s293
        %p295 = pneg %p69
        %p296 = pneg %p66
        %p297 = scmp.lt.s32.totalorder %s22, 1
        %s298 = scalar_select %p297, %s22, 1
        %s299 = smul.addr %s298, 16
        %s300 = smul.addr %s299, 4
        %s301 = scalar_lea.vmem %s2, %s300
        %p302 = pneg %p95
        %p303 = pneg %p92
        %p304 = pneg %p116
        %p305 = pneg %p113
        %p306 = pneg %p137
        %p307 = pneg %p134
        %p308 = pneg %p158
        %p309 = pneg %p155
        %p310 = pneg %p179
        %p311 = pneg %p176
        %p312 = pneg %p205
        %p313 = pneg %p202
        %s314 = sand.u32 %s192, 1
        %s315 = scalar_lea.sflag [#allocation4], %s314
        %s316 = sand.u32 %s192, 1
        %s317 = smul.addr %s316, 16
        %s318 = scalar_lea.vmem [#allocation5], %s317
        %p319 = scmp.lt.s32.totalorder %s22, 1
        %s320 = scalar_select %p319, %s22, 1
        %s321 = smul.addr %s320, 16
        %s322 = smul.addr %s321, 4
        %s323 = scalar_lea.vmem %s0, %s322
        %p324 = scmp.lt.s32.totalorder %s22, 1
        %s325 = scalar_select %p324, %s22, 1
        %s326 = smul.addr %s325, 2
        %s327 = smul.addr %s326, 4
        %s328 = scalar_lea.vmem %s1, %s327
        %p329 = scmp.lt.s32.totalorder %s22, 1
        %s330 = scalar_select %p329, %s22, 1
        %s331 = smul.addr %s330, 16
        %s332 = smul.addr %s331, 4
        %s333 = scalar_lea.vmem %s2, %s332
        %v335 = vld [vmem:[%s323] sm:$0xf]
        %v336 = vld [vmem:[%s323 + $0x4] sm:$0xf]
        %v337 = vld [vmem:[%s323 + $0x8] sm:$0xf]
        %v338 = vld [vmem:[%s323 + $0xc] sm:$0xf]
        %v339 = vld [vmem:[%s323 + $0x10] sm:$0xf]
        %v340 = vld [vmem:[%s323 + $0x14] sm:$0xf]
        %v341 = vld [vmem:[%s323 + $0x18] sm:$0xf]
        %v342 = vld [vmem:[%s323 + $0x1c] sm:$0xf]
        %v343 = vld [vmem:[%s323 + $0x20] sm:$0xf]
        %v344 = vld [vmem:[%s323 + $0x24] sm:$0xf]
        %v345 = vld [vmem:[%s323 + $0x28] sm:$0xf]
        %v346 = vld [vmem:[%s323 + $0x2c] sm:$0xf]
        %v347 = vld [vmem:[%s323 + $0x30] sm:$0xf]
        %v348 = vld [vmem:[%s323 + $0x34] sm:$0xf]
        %v349 = vld [vmem:[%s323 + $0x38] sm:$0xf]
        %v350 = vld [vmem:[%s323 + $0x3c] sm:$0xf]
        %v351 = vld [vmem:[%s333] sm:$0xf]
        %v352 = vld [vmem:[%s333 + $0x4] sm:$0xf]
        %v353 = vld [vmem:[%s333 + $0x8] sm:$0xf]
        %v354 = vld [vmem:[%s333 + $0xc] sm:$0xf]
        %v355 = vld [vmem:[%s333 + $0x10] sm:$0xf]
        %v356 = vld [vmem:[%s333 + $0x14] sm:$0xf]
        %v357 = vld [vmem:[%s333 + $0x18] sm:$0xf]
        %v358 = vld [vmem:[%s333 + $0x1c] sm:$0xf]
        %v359 = vld [vmem:[%s333 + $0x20] sm:$0xf]
        %v360 = vld [vmem:[%s333 + $0x24] sm:$0xf]
        %v361 = vld [vmem:[%s333 + $0x28] sm:$0xf]
        %v362 = vld [vmem:[%s333 + $0x2c] sm:$0xf]
        %v363 = vld [vmem:[%s333 + $0x30] sm:$0xf]
        %v364 = vld [vmem:[%s333 + $0x34] sm:$0xf]
        %v365 = vld [vmem:[%s333 + $0x38] sm:$0xf]
        %v366 = vld [vmem:[%s333 + $0x3c] sm:$0xf]
        %v367 = vld [vmem:[%s3] sm:$0xf]
        %v368 = vld [vmem:[%s3 + $0x4] sm:$0xf]
        %v369 = vld [vmem:[%s3 + $0x8] sm:$0xf]
        %v370 = vld [vmem:[%s3 + $0xc] sm:$0xf]
        %v371 = vld [vmem:[%s4] sm:$0x1]
        %v388 = vunpack.c.l.b16 %v351
        %v389 = vunpack.c.l.b16 %v352
        %v390 = vunpack.c.l.b16 %v353
        %v391 = vunpack.c.l.b16 %v354
        %v392 = vunpack.c.l.b16 %v355
        %v393 = vunpack.c.l.b16 %v356
        %v394 = vunpack.c.l.b16 %v357
        %v395 = vunpack.c.l.b16 %v358
        %v396 = vunpack.c.l.b16 %v359
        %v397 = vunpack.c.l.b16 %v360
        %v398 = vunpack.c.l.b16 %v361
        %v399 = vunpack.c.l.b16 %v362
        %v400 = vunpack.c.l.b16 %v363
        %v401 = vunpack.c.l.b16 %v364
        %v402 = vunpack.c.l.b16 %v365
        %v403 = vunpack.c.l.b16 %v366
        %v404 = vpack.c.b16 %v389, %v388
        %v405 = vpack.c.b16 %v391, %v390
        %v406 = vpack.c.b16 %v393, %v392
        %v407 = vpack.c.b16 %v395, %v394
        %v408 = vpack.c.b16 %v397, %v396
        %v409 = vpack.c.b16 %v399, %v398
        %v410 = vpack.c.b16 %v401, %v400
        %v411 = vpack.c.b16 %v403, %v402
        %v416 = vunpack.c.l.b16 %v367
        %v417 = vunpack.c.l.b16 %v368
        %v418 = vunpack.c.l.b16 %v369
        %v419 = vunpack.c.l.b16 %v370
        %v420 = vpack.c.b16 %v417, %v416
        %v421 = vpack.c.b16 %v419, %v418
        %vm424 = vcmask 261120
        %v426 = vsel %vm424, %v404, 0
        %v429 = vsel %vm424, %v405, 0
        %v432 = vsel %vm424, %v406, 0
        %v435 = vsel %vm424, %v407, 0
        %v438 = vsel %vm424, %v408, 0
        %v441 = vsel %vm424, %v409, 0
        %v444 = vsel %vm424, %v410, 0
        %v447 = vsel %vm424, %v411, 0
        %449 = vmatpush.bf16.msra.mxu0 0
        %450 = vmatpush.bf16.msra.mxu0 0
        %451 = vmatpush.bf16.msra.mxu0 0
        %452 = vmatpush.bf16.msra.mxu0 0
        %453 = vmatpush.bf16.msra.mxu0 0
        %454 = vmatpush.bf16.msra.mxu0 0
        %455 = vmatpush.bf16.msra.mxu0 %v421
        %456 = vmatpush.bf16.msra.mxu0 %v420
        %457 = vmatmul.bf16.gmra.mxu0 %v426
        %v458 = vpop.f32.mrf.mxu0
        %v459 = vadd.f32 0.0, %v458
        %v460 = vpop.f32.mrf.mxu0
        %v461 = vadd.f32 0.0, %v460
        %462 = vmatmul.bf16.gmra.mxu0 %v429
        %v463 = vpop.f32.mrf.mxu0
        %v464 = vadd.f32 0.0, %v463
        %v465 = vpop.f32.mrf.mxu0
        %v466 = vadd.f32 0.0, %v465
        %467 = vmatmul.bf16.gmra.mxu0 %v432
        %v468 = vpop.f32.mrf.mxu0
        %v469 = vadd.f32 0.0, %v468
        %v470 = vpop.f32.mrf.mxu0
        %v471 = vadd.f32 0.0, %v470
        %472 = vmatmul.bf16.gmra.mxu0 %v435
        %v473 = vpop.f32.mrf.mxu0
        %v474 = vadd.f32 0.0, %v473
        %v475 = vpop.f32.mrf.mxu0
        %v476 = vadd.f32 0.0, %v475
        %477 = vmatmul.bf16.gmra.mxu0 %v438
        %v478 = vpop.f32.mrf.mxu0
        %v479 = vadd.f32 0.0, %v478
        %v480 = vpop.f32.mrf.mxu0
        %v481 = vadd.f32 0.0, %v480
        %482 = vmatmul.bf16.gmra.mxu0 %v441
        %v483 = vpop.f32.mrf.mxu0
        %v484 = vadd.f32 0.0, %v483
        %v485 = vpop.f32.mrf.mxu0
        %v486 = vadd.f32 0.0, %v485
        %487 = vmatmul.bf16.gmra.mxu0 %v444
        %v488 = vpop.f32.mrf.mxu0
        %v489 = vadd.f32 0.0, %v488
        %v490 = vpop.f32.mrf.mxu0
        %v491 = vadd.f32 0.0, %v490
        %492 = vmatmul.bf16.gmra.mxu0 %v447
        %v493 = vpop.f32.mrf.mxu0
        %v494 = vadd.f32 0.0, %v493
        %v495 = vpop.f32.mrf.mxu0
        %v496 = vadd.f32 0.0, %v495
        %497 = vdwg.mxu0
        %v498 = vpack.c.bf16 %v461, %v459
        %v499 = vpack.c.bf16 %v466, %v464
        %v500 = vpack.c.bf16 %v471, %v469
        %v501 = vpack.c.bf16 %v476, %v474
        %v502 = vpack.c.bf16 %v481, %v479
        %v503 = vpack.c.bf16 %v486, %v484
        %v504 = vpack.c.bf16 %v491, %v489
        %v505 = vpack.c.bf16 %v496, %v494
        %v507 = vperm.slane %v371, 0
        %v525 = vunpack.c.l.b16 %v335
        %v526 = vunpack.c.l.b16 %v336
        %v527 = vunpack.c.l.b16 %v337
        %v528 = vunpack.c.l.b16 %v338
        %v529 = vunpack.c.l.b16 %v339
        %v530 = vunpack.c.l.b16 %v340
        %v531 = vunpack.c.l.b16 %v341
        %v532 = vunpack.c.l.b16 %v342
        %v533 = vunpack.c.l.b16 %v343
        %v534 = vunpack.c.l.b16 %v344
        %v535 = vunpack.c.l.b16 %v345
        %v536 = vunpack.c.l.b16 %v346
        %v537 = vunpack.c.l.b16 %v347
        %v538 = vunpack.c.l.b16 %v348
        %v539 = vunpack.c.l.b16 %v349
        %v540 = vunpack.c.l.b16 %v350
        %v541 = vpack.c.b16 %v526, %v525
        %v542 = vpack.c.b16 %v528, %v527
        %v543 = vpack.c.b16 %v530, %v529
        %v544 = vpack.c.b16 %v532, %v531
        %v545 = vpack.c.b16 %v534, %v533
        %v546 = vpack.c.b16 %v536, %v535
        %v547 = vpack.c.b16 %v538, %v537
        %v548 = vpack.c.b16 %v540, %v539
        %557 = vmatpush.bf16.msra.mxu0 %v505
        %558 = vmatpush.bf16.msra.mxu0 %v504
        %559 = vmatpush.bf16.msra.mxu0 %v503
        %560 = vmatpush.bf16.msra.mxu0 %v502
        %561 = vmatpush.bf16.msra.mxu0 %v501
        %562 = vmatpush.bf16.msra.mxu0 %v500
        %563 = vmatpush.bf16.msra.mxu0 %v499
        %564 = vmatpush.bf16.msra.mxu0 %v498
        %565 = vmatmul.bf16.gmra.mxu0 %v541
        %v566 = vpop.f32.mrf.mxu0
        %v567 = vadd.f32 %v507, %v566
        %v568 = vpop.f32.mrf.mxu0
        %v569 = vadd.f32 %v507, %v568
        %570 = vmatmul.bf16.gmra.mxu0 %v542
        %v571 = vpop.f32.mrf.mxu0
        %v572 = vadd.f32 %v507, %v571
        %v573 = vpop.f32.mrf.mxu0
        %v574 = vadd.f32 %v507, %v573
        %575 = vmatmul.bf16.gmra.mxu0 %v543
        %v576 = vpop.f32.mrf.mxu0
        %v577 = vadd.f32 %v507, %v576
        %v578 = vpop.f32.mrf.mxu0
        %v579 = vadd.f32 %v507, %v578
        %580 = vmatmul.bf16.gmra.mxu0 %v544
        %v581 = vpop.f32.mrf.mxu0
        %v582 = vadd.f32 %v507, %v581
        %v583 = vpop.f32.mrf.mxu0
        %v584 = vadd.f32 %v507, %v583
        %585 = vmatmul.bf16.gmra.mxu0 %v545
        %v586 = vpop.f32.mrf.mxu0
        %v587 = vadd.f32 %v507, %v586
        %v588 = vpop.f32.mrf.mxu0
        %v589 = vadd.f32 %v507, %v588
        %590 = vmatmul.bf16.gmra.mxu0 %v546
        %v591 = vpop.f32.mrf.mxu0
        %v592 = vadd.f32 %v507, %v591
        %v593 = vpop.f32.mrf.mxu0
        %v594 = vadd.f32 %v507, %v593
        %595 = vmatmul.bf16.gmra.mxu0 %v547
        %v596 = vpop.f32.mrf.mxu0
        %v597 = vadd.f32 %v507, %v596
        %v598 = vpop.f32.mrf.mxu0
        %v599 = vadd.f32 %v507, %v598
        %600 = vmatmul.bf16.gmra.mxu0 %v548
        %v601 = vpop.f32.mrf.mxu0
        %v602 = vadd.f32 %v507, %v601
        %v603 = vpop.f32.mrf.mxu0
        %v604 = vadd.f32 %v507, %v603
        %605 = vdwg.mxu0
        %v606 = vpack.c.bf16 %v569, %v567
        %v607 = vpack.c.bf16 %v574, %v572
        %v608 = vpack.c.bf16 %v579, %v577
        %v609 = vpack.c.bf16 %v584, %v582
        %v610 = vpack.c.bf16 %v589, %v587
        %v611 = vpack.c.bf16 %v594, %v592
        %v612 = vpack.c.bf16 %v599, %v597
        %v613 = vpack.c.bf16 %v604, %v602
        %v614 = vld [vmem:[#allocation2] sm:$0xf]
        %v615 = vld [vmem:[#allocation2 + $0x4] sm:$0xf]
        %v616 = vld [vmem:[#allocation2 + $0x8] sm:$0xf]
        %v617 = vld [vmem:[#allocation2 + $0xc] sm:$0xf]
        %v618 = vld [vmem:[%s6] sm:$0x1]
        %v623 = vunpack.c.l.b16 %v614
        %v624 = vunpack.c.l.b16 %v615
        %v625 = vunpack.c.l.b16 %v616
        %v626 = vunpack.c.l.b16 %v617
        %v627 = vpack.c.b16 %v624, %v623
        %v628 = vpack.c.b16 %v626, %v625
        %v632 = vsel %vm424, %v606, 0
        %v635 = vsel %vm424, %v607, 0
        %v638 = vsel %vm424, %v608, 0
        %v641 = vsel %vm424, %v609, 0
        %v644 = vsel %vm424, %v610, 0
        %v647 = vsel %vm424, %v611, 0
        %v650 = vsel %vm424, %v612, 0
        %v653 = vsel %vm424, %v613, 0
        %655 = vmatpush.bf16.msra.mxu0 0
        %656 = vmatpush.bf16.msra.mxu0 0
        %657 = vmatpush.bf16.msra.mxu0 0
        %658 = vmatpush.bf16.msra.mxu0 0
        %659 = vmatpush.bf16.msra.mxu0 0
        %660 = vmatpush.bf16.msra.mxu0 0
        %661 = vmatpush.bf16.msra.mxu0 %v628
        %662 = vmatpush.bf16.msra.mxu0 %v627
        %663 = vmatmul.bf16.gmra.mxu0 %v632
        %v664 = vpop.f32.mrf.mxu0
        %v665 = vadd.f32 0.0, %v664
        %v666 = vpop.f32.mrf.mxu0
        %v667 = vadd.f32 0.0, %v666
        %668 = vmatmul.bf16.gmra.mxu0 %v635
        %v669 = vpop.f32.mrf.mxu0
        %v670 = vadd.f32 0.0, %v669
        %v671 = vpop.f32.mrf.mxu0
        %v672 = vadd.f32 0.0, %v671
        %673 = vmatmul.bf16.gmra.mxu0 %v638
        %v674 = vpop.f32.mrf.mxu0
        %v675 = vadd.f32 0.0, %v674
        %v676 = vpop.f32.mrf.mxu0
        %v677 = vadd.f32 0.0, %v676
        %678 = vmatmul.bf16.gmra.mxu0 %v641
        %v679 = vpop.f32.mrf.mxu0
        %v680 = vadd.f32 0.0, %v679
        %v681 = vpop.f32.mrf.mxu0
        %v682 = vadd.f32 0.0, %v681
        %683 = vmatmul.bf16.gmra.mxu0 %v644
        %v684 = vpop.f32.mrf.mxu0
        %v685 = vadd.f32 0.0, %v684
        %v686 = vpop.f32.mrf.mxu0
        %v687 = vadd.f32 0.0, %v686
        %688 = vmatmul.bf16.gmra.mxu0 %v647
        %v689 = vpop.f32.mrf.mxu0
        %v690 = vadd.f32 0.0, %v689
        %v691 = vpop.f32.mrf.mxu0
        %v692 = vadd.f32 0.0, %v691
        %693 = vmatmul.bf16.gmra.mxu0 %v650
        %v694 = vpop.f32.mrf.mxu0
        %v695 = vadd.f32 0.0, %v694
        %v696 = vpop.f32.mrf.mxu0
        %v697 = vadd.f32 0.0, %v696
        %698 = vmatmul.bf16.gmra.mxu0 %v653
        %v699 = vpop.f32.mrf.mxu0
        %v700 = vadd.f32 0.0, %v699
        %v701 = vpop.f32.mrf.mxu0
        %v702 = vadd.f32 0.0, %v701
        %703 = vdwg.mxu0
        %v704 = vld [vmem:[%s328] sm:$0xf]
        %v705 = vld [vmem:[%s328 + $0x4] sm:$0xf]
        %v706 = vpack.c.bf16 %v667, %v665
        %v707 = vpack.c.bf16 %v672, %v670
        %v708 = vpack.c.bf16 %v677, %v675
        %v709 = vpack.c.bf16 %v682, %v680
        %v710 = vpack.c.bf16 %v687, %v685
        %v711 = vpack.c.bf16 %v692, %v690
        %v712 = vpack.c.bf16 %v697, %v695
        %v713 = vpack.c.bf16 %v702, %v700
        %v716 = vunpack.c.l.b16 %v704
        %v717 = vunpack.c.l.b16 %v705
        %v718 = vpack.c.b16 %v717, %v716
        %720 = vmatpush.bf16.msra.mxu0 %v713
        %721 = vmatpush.bf16.msra.mxu0 %v712
        %722 = vmatpush.bf16.msra.mxu0 %v711
        %723 = vmatpush.bf16.msra.mxu0 %v710
        %724 = vmatpush.bf16.msra.mxu0 %v709
        %725 = vmatpush.bf16.msra.mxu0 %v708
        %726 = vmatpush.bf16.msra.mxu0 %v707
        %727 = vmatpush.bf16.msra.mxu0 %v706
        %728 = vmatmul.bf16.gmra.mxu0 %v718
        %v729 = vpop.f32.mrf.mxu0
        %v730 = vadd.f32 0.0, %v729
        %v731 = vpop.f32.mrf.mxu0
        %v732 = vadd.f32 0.0, %v731
        %733 = vdwg.mxu0
        %v734 = vmul.f32 %v730, 0.35355338
        %v735 = vmul.f32 %v732, 0.35355338
        %v736 = vmul.f32 %v618, 2.828427
        %v738 = vperm.slane %v736, 0
        %v740 = vadd.f32 %v734, %v738
        %v741 = vadd.f32 %v735, %v738
        %742 = vst.msk [vmem:[%s318] sm:$0xff] %vm424, %v740
        %743 = vst.msk [vmem:[%s318 + $0x8] sm:$0xff] %vm424, %v741
        %s744 = sand.u32 %s192, 1
        %s745 = scalar_lea.sflag [#allocation4], %s744
        %s746 = sand.u32 %s192, 1
        %s747 = smul.addr %s746, 16
        %s748 = scalar_lea.vmem [#allocation5], %s747
        // Predicated region
        $region53: #{tpu_custom_call.1} parent=47 // pred_check
          %p749 = pneg %p202
        $region54: #{tpu_custom_call.1} parent=47 // pred_check_branch
          %751 = sbr.rel (%p749) target = $region56
        $region55: #{tpu_custom_call.1} parent=47 // pred_region
          %753 = vsyncadd %s745, 0
          %s754 = smul.addr %s22, 2
          %s755 = smul.addr %s754, 8
          %s756 = scalar_lea.hbm %s7, %s755
          %s757 = sshll.u32 %s748, 4
          %s758 = int_to_ptr.vmem [resolvable:$true] %s757
          %s759 = sshll.u32 %s756, 4
          %s760 = int_to_ptr.hbm [resolvable:$true] %s759
          %765 = dma.vmem_to_hbm [thread:$0]  %s758, 256, %s760, %s745, 128, 128, 8
        $region56: #{tpu_custom_call.1} parent=47 // pred_fallthru
          _
      $region48: #{tpu_custom_call.1} parent=5 // pred_fallthru
        _
      %p766 = scmp.le.s32.totalorder 2, %s17
      // Predicated region
      $region57: #{tpu_custom_call.1} parent=5 // pred_check
        %p767 = pneg %p766
      $region58: #{tpu_custom_call.1} parent=5 // pred_check_branch
        %769 = sbr.rel (%p767) target = $region60
      $region59: #{tpu_custom_call.1} parent=5 // pred_region
        %s770 = ssub.s32 %s17, 2
        // Predicated region
        $region61: #{tpu_custom_call.1} parent=59 // pred_check
          %p771 = pneg %p208
        $region62: #{tpu_custom_call.1} parent=59 // pred_check_branch
          %773 = sbr.rel (%p771) target = $region64
        $region63: #{tpu_custom_call.1} parent=59 // pred_region
          %s774 = sand.u32 %s193, 1
          %s775 = scalar_lea.sflag [#allocation4], %s774
          %s776 = sand.u32 %s193, 1
          %s777 = smul.addr %s776, 16
          %s778 = scalar_lea.vmem [#allocation5], %s777
          %780 = dma.done %s775, 256
        $region64: #{tpu_custom_call.1} parent=59 // pred_fallthru
          _
      $region60: #{tpu_custom_call.1} parent=5 // pred_fallthru
        _
    $region6: #{tpu_custom_call.1} parent=1 // loop_footer
      %s21 = sadd.s32 1, %s17
    $region7: #{tpu_custom_call.1} parent=1 // loop_footer_branch
      %16 = sbr.rel target = $region3
    $region8: #{tpu_custom_call.1} parent=1 // loop_exit
      _
    %781 = vsyncpa [#allocation3], 1
    %s782 = scalar_lea.sflag [#allocation3], 1
    %783 = vsyncpa %s782, 1
    %784 = vsyncpa [#allocation4], 1
    %s785 = scalar_lea.sflag [#allocation4], 1
    %786 = vsyncpa %s785, 1

</llo_original>
